<compile_context>
chip_gen: v7x
topology: tpu7x:2x2x1
jax: 0.10.0
libtpu: 0.0.40
codegen_flags: <defaults>
</compile_context>

<pallas_src>
import math

import jax
import jax.numpy as jnp
from jax.experimental import pallas as pl
from jax.experimental.pallas import tpu as pltpu

# Batch-tile size: large enough to amortize the ~0.35us/step overhead and sit on the HBM
# roofline, small enough (F<=40 -> well under 1 MiB/buffer at f32) to fit comfortably inside
# the scoped VMEM defaults on v5e (16 MiB), v6e (32 MiB) and v7x (32 MiB of 64 MiB physical).
DEFAULT_TILE_B = 4096


def _classifier_kernel(x_ref, w_ref, b_ref, o_ref):
    """Fused linear + log-softmax on one batch tile.

    x_ref: (TILE_B, F)  flattened bounding boxes
    w_ref: (F, N)       linear weight, pre-transposed in the wrapper
    b_ref: (1, N)       linear bias
    o_ref: (TILE_B, N)  log_softmax(x @ w + b) along the class axis (f32)
    """
    x = x_ref[...].astype(jnp.float32)
    w = w_ref[...].astype(jnp.float32)
    b = b_ref[...].astype(jnp.float32)

    # Linear: (TILE_B, F) @ (F, N) + (1, N)  -> MXU matmul, f32 accumulation.
    logits = jnp.dot(x, w, preferred_element_type=jnp.float32) + b

    # Numerically stable log-softmax over the last (class) axis.
    m = jnp.max(logits, axis=-1, keepdims=True)
    z = logits - m
    lse = jnp.log(jnp.sum(jnp.exp(z), axis=-1, keepdims=True))
    o_ref[...] = (z - lse).astype(o_ref.dtype)


def _run_classifier(x_flat, weight, bias, tile_b=DEFAULT_TILE_B):
    """Call the Pallas kernel on a flattened (B, F) input.

    weight: (N, F) PyTorch-layout linear weight (transposed here, once).
    bias:   (N,)
    """
    B, F = x_flat.shape
    N = weight.shape[0]

    # One-time layout plumbing in the wrapper (free relative to per-step in-kernel work).
    w_t = jnp.transpose(weight)          # (F, N)
    bias2d = bias.reshape(1, N)          # (1, N)

    # Batch tiling: if B fits in one tile, use a single full-extent block (any B is legal
    # since block == full array dim). Otherwise pad B up to a multiple of tile_b so every
    # block is aligned; padded rows are computed but sliced away below.
    if B <= tile_b:
        tile_b_eff = B
        b_padded = B
    else:
        tile_b_eff = tile_b
        b_padded = pl.cdiv(B, tile_b) * tile_b
        if b_padded != B:
            x_flat = jnp.pad(x_flat, ((0, b_padded - B), (0, 0)))

    grid = (b_padded // tile_b_eff,)

    cost = pl.CostEstimate(
        flops=2 * b_padded * F * N,
        transcendentals=b_padded * N,                       # exp in log-softmax
        bytes_accessed=(b_padded * F * x_flat.dtype.itemsize
                        + F * N * w_t.dtype.itemsize
                        + b_padded * N * 4),
    )

    out = pl.pallas_call(
        _classifier_kernel,
        out_shape=jax.ShapeDtypeStruct((b_padded, N), jnp.float32),
        grid=grid,
        in_specs=[
            pl.BlockSpec((tile_b_eff, F), lambda i: (i, 0)),   # x: streams per batch tile
            pl.BlockSpec((F, N), lambda i: (0, 0)),            # weight: resident in VMEM
            pl.BlockSpec((1, N), lambda i: (0, 0)),            # bias: resident in VMEM
        ],
        out_specs=pl.BlockSpec((tile_b_eff, N), lambda i: (i, 0)),
        compiler_params=pltpu.CompilerParams(
            dimension_semantics=("parallel",),
        ),
        cost_estimate=cost,
    )(x_flat, w_t, bias2d)

    return out[:B]


def _init_linear_params(key, in_features, out_features, dtype=jnp.float32):
    """Deterministic init matching nn.Linear's default (kaiming-uniform-ish)."""
    kw, kb = jax.random.split(key)
    bound = 1.0 / math.sqrt(in_features)
    weight = jax.random.uniform(
        kw, (out_features, in_features), dtype, minval=-bound, maxval=bound
    )
    bias = jax.random.uniform(
        kb, (out_features,), dtype, minval=-bound, maxval=bound
    )
    return weight, bias


class BoundingBoxClassifier:
    """JAX/Pallas port of the PyTorch BoundingBoxClassifier."""

    def __init__(self, box_feature_dim, key):
        # LazyLinear in_features are determined by the flattened input:
        #   in_features = shape[1] * prod(shape[2:]) = N * box_feature_dim
        k2, k5, k10 = jax.random.split(key, 3)
        self.params = {
            2: _init_linear_params(k2, 2 * box_feature_dim, 2),
            5: _init_linear_params(k5, 5 * box_feature_dim, 5),
            10: _init_linear_params(k10, 10 * box_feature_dim, 10),
        }

    def __call__(self, data):
        bounding_boxes = data[0]
        n = bounding_boxes.shape[1]
        if n not in (2, 5, 10):
            raise ValueError(f"Unsupported number of boxes: {n}")
        weight, bias = self.params[n]
        B = bounding_boxes.shape[0]
        # nn.Flatten(); inputs could also be fed as bf16 to halve HBM read traffic —
        # the kernel casts to f32 before the matmul / softmax either way.
        x_flat = bounding_boxes.reshape(B, -1)
        return _run_classifier(x_flat, weight, bias)


if __name__ == "__main__":
    key = jax.random.PRNGKey(0)
    k_model, k_data = jax.random.split(key)

    # Small, deterministic example: batch=2, 10 bounding boxes of 4 coords each.
    B, N_BOXES, BOX_DIM = 2, 10, 4
    bounding_boxes = jax.random.uniform(
        k_data, (B, N_BOXES, BOX_DIM), dtype=jnp.float32
    )

    model = BoundingBoxClassifier(box_feature_dim=BOX_DIM, key=k_model)
    out = model((bounding_boxes,))
    out = jax.block_until_ready(out)

    # Sanity: log-softmax rows should exp-sum to ~1, output is f32 (PyTorch parity).
    row_sums = jnp.exp(out).sum(axis=1)
    assert out.shape == (B, N_BOXES)
    assert out.dtype == jnp.float32
    assert bool(jnp.all(jnp.abs(row_sums - 1.0) < 1e-5))

    # Also exercise the tiled (B > TILE_B) path once with a small tile to cover padding.
    big_B = 20
    big_boxes = jax.random.uniform(
        jax.random.PRNGKey(1), (big_B, N_BOXES, BOX_DIM), dtype=jnp.float32
    )
    weight, bias = model.params[N_BOXES]
    out_big = _run_classifier(big_boxes.reshape(big_B, -1), weight, bias, tile_b=8)
    out_big = jax.block_until_ready(out_big)
    assert out_big.shape == (big_B, N_BOXES)
    assert bool(jnp.all(jnp.abs(jnp.exp(out_big).sum(axis=1) - 1.0) < 1e-5))

    print("KERNEL_OK")
</pallas_src>

<mosaic_0001>
module attributes {stable_mosaic.version = 11 : i64} {
  func.func @_classifier_kernel(%arg0: i32, %arg1: memref<2x40xf32, #tpu.memory_space<vmem>>, %arg2: memref<40x10xf32, #tpu.memory_space<vmem>>, %arg3: memref<1x10xf32, #tpu.memory_space<vmem>>, %arg4: memref<2x10xf32, #tpu.memory_space<vmem>>) attributes {dimension_semantics = [#tpu.dimension_semantics<parallel>], iteration_bounds = array<i64: 1>, scalar_prefetch = 0 : i64, scratch_operands = 0 : i64, tpu.core_type = #tpu.core_type<tc>, window_params = [{transform_indices = @transform_0, window_bounds = array<i64: 2, 40>}, {pipeline_mode = #tpu.pipeline_mode<synchronous>, transform_indices = @transform_1, window_bounds = array<i64: 40, 10>}, {pipeline_mode = #tpu.pipeline_mode<synchronous>, transform_indices = @transform_2, window_bounds = array<i64: 1, 10>}, {transform_indices = @transform_3, window_bounds = array<i64: 2, 10>}]} {
    %c0 = arith.constant 0 : index
    %c0_0 = arith.constant 0 : index
    %0 = vector.load %arg1[%c0, %c0_0] : memref<2x40xf32, #tpu.memory_space<vmem>>, vector<2x40xf32>
    %c0_1 = arith.constant 0 : index
    %c0_2 = arith.constant 0 : index
    %1 = vector.load %arg2[%c0_1, %c0_2] : memref<40x10xf32, #tpu.memory_space<vmem>>, vector<40x10xf32>
    %c0_3 = arith.constant 0 : index
    %c0_4 = arith.constant 0 : index
    %2 = vector.load %arg3[%c0_3, %c0_4] : memref<1x10xf32, #tpu.memory_space<vmem>>, vector<1x10xf32>
    %cst = arith.constant dense<0.000000e+00> : vector<2x10xf32>
    %3 = tpu.matmul %0, %1, %cst {dimension_numbers = #tpu.dot_dimension_numbers<[1], [0], [0], [1], [0, 0, 1, 1], [], []>} : vector<2x40xf32>, vector<40x10xf32>, vector<2x10xf32> -> vector<2x10xf32>
    %4 = vector.broadcast %2 : vector<1x10xf32> to vector<2x10xf32>
    %5 = arith.addf %3, %4 : vector<2x10xf32>
    %cst_5 = arith.constant dense<0xFF800000> : vector<2xf32>
    %6 = vector.multi_reduction <maximumf>, %5, %cst_5 [1] : vector<2x10xf32> to vector<2xf32>
    %7 = vector.shape_cast %6 : vector<2xf32> to vector<2x1xf32>
    %8 = vector.broadcast %7 : vector<2x1xf32> to vector<2x10xf32>
    %9 = arith.subf %5, %8 : vector<2x10xf32>
    %10 = math.exp %9 : vector<2x10xf32>
    %cst_6 = arith.constant dense<0.000000e+00> : vector<2xf32>
    %11 = vector.multi_reduction <add>, %10, %cst_6 [1] : vector<2x10xf32> to vector<2xf32>
    %12 = vector.shape_cast %11 : vector<2xf32> to vector<2x1xf32>
    %13 = math.log %12 : vector<2x1xf32>
    %14 = vector.broadcast %13 : vector<2x1xf32> to vector<2x10xf32>
    %15 = arith.subf %9, %14 : vector<2x10xf32>
    %c0_7 = arith.constant 0 : index
    %c0_8 = arith.constant 0 : index
    %16 = vector.load %arg4[%c0_7, %c0_8] : memref<2x10xf32, #tpu.memory_space<vmem>>, vector<2x10xf32>
    tpu.vector_store %arg4[%c0_7, %c0_8], %15 {strides = array<i32>} : memref<2x10xf32, #tpu.memory_space<vmem>>, vector<2x10xf32>,
    return
  }
  func.func @transform_0(%arg0: i32) -> (i32, i32) {
    %c0_i32 = arith.constant 0 : i32
    %c0_i32_0 = arith.constant 0 : i32
    return %arg0, %c0_i32 : i32, i32
  }
  func.func @transform_1(%arg0: i32) -> (i32, i32) {
    %c0_i32 = arith.constant 0 : i32
    %c0_i32_0 = arith.constant 0 : i32
    %c0_i32_1 = arith.constant 0 : i32
    return %c0_i32, %c0_i32_0 : i32, i32
  }
  func.func @transform_2(%arg0: i32) -> (i32, i32) {
    %c0_i32 = arith.constant 0 : i32
    %c0_i32_0 = arith.constant 0 : i32
    %c0_i32_1 = arith.constant 0 : i32
    return %c0_i32, %c0_i32_0 : i32, i32
  }
  func.func @transform_3(%arg0: i32) -> (i32, i32) {
    %c0_i32 = arith.constant 0 : i32
    %c0_i32_0 = arith.constant 0 : i32
    return %arg0, %c0_i32 : i32, i32
  }
}

</mosaic_0001>

<llo_original>
// kernel: tpu_custom_call.1
$region0: #{tpu_custom_call.1}
  #allocation0 [shape = 'u32[]', space=smem, size = 0x4, offset = 0x4, fixed_abs, tag = 'smem constant byte address 0x4 - core index']
  #allocation1 [shape = 'u32[144,128]{1,0:T(1,128)}', space=vmem, size = 0x12000, scoped, tag = 'internal scratch']
  %s0 = inlined_call_operand.vmem [shape: f32[2,40], index: 0, kind: input, shape index: {}]
  %s1 = inlined_call_operand.vmem [shape: f32[40,10], index: 1, kind: input, shape index: {}]
  %s2 = inlined_call_operand.vmem [shape: f32[1,10], index: 2, kind: input, shape index: {}]
  %s3 = inlined_call_operand.hbm [shape: f32[2,10], index: 3, kind: output, shape index: {}]
  %s4 = sld [smem:[#allocation0]]
  $region22: #{tpu_custom_call.1} parent=0
    _
  %s6 = ssub.s32 1, %s4
  %s7 = scalar_select 0, %s6, %s4
  $region1: #{tpu_custom_call.1} parent=0
    #allocation2 [shape = 'u8[1024]{0}', space=vmem, size = 0x400, scoped, tag = 'output window, operand 0, single buffered']
    #allocation3 [shape = 's32[1]{0}', space=sflag, size = 0x4, scoped, tag = 'scoped memory for tpu_custom_call.1']
    %8 = vsyncpa [#allocation3], 0
    // Predicated region
    $region2: #{tpu_custom_call.1} parent=1 // pred_check
      _
    $region3: #{tpu_custom_call.1} parent=1 // pred_check_branch
      %10 = sbr.rel (0) target = $region5
    $region4: #{tpu_custom_call.1} parent=1 // pred_region
      _
    $region5: #{tpu_custom_call.1} parent=1 // pred_fallthru
      _
    // Predicated region
    $region6: #{tpu_custom_call.1} parent=1 // pred_check
      _
    $region7: #{tpu_custom_call.1} parent=1 // pred_check_branch
      %12 = sbr.rel (0) target = $region9
    $region8: #{tpu_custom_call.1} parent=1 // pred_region
      _
    $region9: #{tpu_custom_call.1} parent=1 // pred_fallthru
      _
    // Predicated region
    $region10: #{tpu_custom_call.1} parent=1 // pred_check
      _
    $region11: #{tpu_custom_call.1} parent=1 // pred_check_branch
      %14 = sbr.rel (0) target = $region13
    $region12: #{tpu_custom_call.1} parent=1 // pred_region
      _
    $region13: #{tpu_custom_call.1} parent=1 // pred_fallthru
      _
    %v15 = vld [vmem:[%s0] sm:$0x3]
    %v16 = vld [vmem:[%s1] sm:$0xff]
    %v17 = vld [vmem:[%s1 + $0x8] sm:$0xff]
    %v18 = vld [vmem:[%s1 + $0x10] sm:$0xff]
    %v19 = vld [vmem:[%s1 + $0x18] sm:$0xff]
    %v20 = vld [vmem:[%s1 + $0x20] sm:$0xff]
    %v21 = vld [vmem:[%s2] sm:$0x1]
    %v23 = vlaneseq
    %v24 = vshrl.u32 %v23, 7
    %v25 = vsub.s32 0, %v24
    %v26 = vrot.slane %v21, %v25
    %vm28 = vcmask 326656
    %v30 = vsel %vm28, %v15, 0
    %32 = vmatprep.subr.mxu0 0.0
    %33 = vmatpush1.msra.mxu0 %v16
    %34 = vmatprep.subr.mxu0 0.0
    %35 = vmatpush1.msra.mxu0 %v17
    %36 = vmatprep.subr.mxu0 0.0
    %37 = vmatpush1.msra.mxu0 %v18
    %38 = vmatprep.subr.mxu0 0.0
    %39 = vmatpush1.msra.mxu0 %v19
    %40 = vmatprep.subr.mxu0 0.0
    %41 = vmatpush1.msra.mxu0 %v20
    %42 = vmatprep.subr.mxu0 0.0
    %43 = vmatpush1.msra.mxu0 0.0
    %44 = vmatprep.subr.mxu0 0.0
    %45 = vmatpush1.msra.mxu0 0.0
    %46 = vmatprep.subr.mxu0 0.0
    %47 = vmatpush1.msra.mxu0 0.0
    %48 = vmatprep.subr.mxu0 0.0
    %49 = vmatpush1.msra.mxu0 0.0
    %50 = vmatprep.subr.mxu0 0.0
    %51 = vmatpush1.msra.mxu0 0.0
    %52 = vmatprep.subr.mxu0 0.0
    %53 = vmatpush1.msra.mxu0 0.0
    %54 = vmatprep.subr.mxu0 0.0
    %55 = vmatpush1.msra.mxu0 0.0
    %56 = vmatprep.subr.mxu0 0.0
    %57 = vmatpush1.msra.mxu0 0.0
    %58 = vmatprep.subr.mxu0 0.0
    %59 = vmatpush1.msra.mxu0 0.0
    %60 = vmatprep.subr.mxu0 0.0
    %61 = vmatpush1.msra.mxu0 0.0
    %62 = vmatprep.subr.mxu0 0.0
    %63 = vmatpush1.msra.mxu0 0.0
    %64 = vmatprep.subr.mxu0 0.0
    %65 = vmatpush1.msra.mxu0 0.0
    %66 = vmatprep.subr.mxu0 0.0
    %67 = vmatpush1.msra.mxu0 0.0
    %68 = vmatprep.subr.mxu0 0.0
    %69 = vmatpush1.msra.mxu0 0.0
    %70 = vmatprep.subr.mxu0 0.0
    %71 = vmatpush1.msra.mxu0 0.0
    %72 = vmatprep.subr.mxu0 0.0
    %73 = vmatpush1.msra.mxu0 0.0
    %74 = vmatprep.subr.mxu0 0.0
    %75 = vmatpush1.msra.mxu0 0.0
    %76 = vmatprep.subr.mxu0 0.0
    %77 = vmatpush1.msra.mxu0 0.0
    %78 = vmatprep.subr.mxu0 0.0
    %79 = vmatpush1.msra.mxu0 0.0
    %80 = vmatprep.subr.mxu0 0.0
    %81 = vmatpush1.msra.mxu0 0.0
    %82 = vmatprep.subr.mxu0 0.0
    %83 = vmatpush1.msra.mxu0 0.0
    %84 = vmatprep.subr.mxu0 0.0
    %85 = vmatpush1.msra.mxu0 0.0
    %86 = vmatprep.subr.mxu0 0.0
    %87 = vmatpush1.msra.mxu0 0.0
    %88 = vmatprep.subr.mxu0 0.0
    %89 = vmatpush1.msra.mxu0 0.0
    %90 = vmatprep.subr.mxu0 0.0
    %91 = vmatpush1.msra.mxu0 0.0
    %92 = vmatprep.subr.mxu0 0.0
    %93 = vmatpush1.msra.mxu0 0.0
    %94 = vmatprep.subr.mxu0 0.0
    %95 = vmatpush1.msra.mxu0 0.0
    %96 = vmatprep.mubr.f32.mxu0 0.0
    %97 = vmatmul.mubr.f32.gmra.mrb[0].mxu0 %v30
    %v98 = vpop.f32.mrb[0].mxu0
    %v99 = vadd.f32 %v26, %v98
    %v100 = vpop.f32.mrb[0].mxu0
    %101 = vdwg.mxu0
    %vm102 = vcmask 74752
    %v103 = vsel %vm102, %v99, -inf
    %104 = vmax.xlane.f32.xlu0 %v103
    %v105 = vpop.xlane.xlu0 %104
    %v106 = vsub.f32 %v99, %v105
    %v107 = vmul.f32 %v106, 1.442695
    %v108 = vpow.pop %v107
    %v109 = vsel %vm102, %v108, 0.0
    %110 = vadd.xlane.f32.xlu0 %v109
    %v111 = vpop.xlane.xlu0 %110
    %v112 = vlog2.pop %v111
    %v113 = vmul.f32 %v112, 0.6931472
    %v114 = vsub.f32 %v106, %v113
    %115 = vst.msk [vmem:[#allocation2] sm:$0x3] %vm102, %v114
    // Predicated region
    $region14: #{tpu_custom_call.1} parent=1 // pred_check
      _
    $region15: #{tpu_custom_call.1} parent=1 // pred_check_branch
      %117 = sbr.rel (0) target = $region17
    $region16: #{tpu_custom_call.1} parent=1 // pred_region
      %s119 = ssub.s32 32, 32
      %120 = vsyncadd [#allocation3], %s119
      %s122 = sshll.u32 [#allocation2], 4
      %s123 = int_to_ptr.vmem [resolvable:$true] %s122
      %125 = dma.vmem_to_hbm [thread:$0]  %s123, 32, %s3, [#allocation3]
    $region17: #{tpu_custom_call.1} parent=1 // pred_fallthru
      _
    // Predicated region
    $region18: #{tpu_custom_call.1} parent=1 // pred_check
      _
    $region19: #{tpu_custom_call.1} parent=1 // pred_check_branch
      %127 = sbr.rel (0) target = $region21
    $region20: #{tpu_custom_call.1} parent=1 // pred_region
      %128 = dma.done [#allocation3], 32
    $region21: #{tpu_custom_call.1} parent=1 // pred_fallthru
      _
    %129 = vsyncpa [#allocation3], 1

</llo_original>
